<compile_context>
chip_gen: v7x
topology: tpu7x:2x2x1
jax: 0.10.0
libtpu: 0.0.40
codegen_flags: <defaults>
</compile_context>

<pallas_src>
import jax
import jax.numpy as jnp
import numpy as np
from jax.experimental import pallas as pl
from jax.experimental.pallas import tpu as pltpu

LOWER = 5e-06

_SUBLANE, _LANE = 8, 128
_TILE = _SUBLANE * _LANE  # 1024 f32 elements = one vreg per operand per step


# ----------------------------------------------------------------------------
# Pallas kernel: fully fused elementwise Toy objective
# ----------------------------------------------------------------------------
def _toy_kernel(x1_ref, x2_ref, f1_ref, f2_ref):
    x1 = x1_ref[...]
    x2 = x2_ref[...]

    tanh_negx2 = jnp.tanh(-x2)                       # EUP
    # torch.clamp(v, LOWER) == max(v, LOWER)  (min-clamp only)
    f1 = jnp.log(jnp.maximum(jnp.abs(0.5 * (-x1 - 7.0) - tanh_negx2), LOWER)) + 6.0
    f2 = jnp.log(jnp.maximum(jnp.abs(0.5 * (-x1 + 3.0) + tanh_negx2 + 2.0), LOWER)) + 6.0

    c1 = jnp.maximum(jnp.tanh(x2 * 0.5), 0.0)        # clamp(·, 0) == relu
    c2 = jnp.maximum(jnp.tanh(-x2 * 0.5), 0.0)

    f1_sq = ((-x1 + 7.0) ** 2 + 0.1 * (-x2 - 8.0) ** 2) / 10.0 - 20.0
    f2_sq = ((-x1 - 7.0) ** 2 + 0.1 * (-x2 - 8.0) ** 2) / 10.0 - 20.0

    f1_ref[...] = f1 * c1 + f1_sq * c2
    f2_ref[...] = f2 * c1 + f2_sq * c2


def _toy_pallas(x1_flat, x2_flat):
    """x1_flat / x2_flat: 1-D f32 arrays of identical length B.
    Returns (f1, f2), each of shape (B,)."""
    B = x1_flat.shape[0]
    Bp = ((B + _TILE - 1) // _TILE) * _TILE          # pad to whole (8,128) tiles
    R = Bp // _LANE                                  # rows (multiple of 8)

    def to_tiles(v):
        v = jnp.zeros((Bp,), jnp.float32).at[:B].set(v)
        return v.reshape(R, _LANE)

    x1t, x2t = to_tiles(x1_flat), to_tiles(x2_flat)

    spec = pl.BlockSpec((_SUBLANE, _LANE), lambda i: (i, 0))
    f1t, f2t = pl.pallas_call(
        _toy_kernel,
        out_shape=(jax.ShapeDtypeStruct((R, _LANE), jnp.float32),
                   jax.ShapeDtypeStruct((R, _LANE), jnp.float32)),
        grid=(R // _SUBLANE,),
        in_specs=[spec, spec],
        out_specs=(spec, spec),
        compiler_params=pltpu.CompilerParams(
            dimension_semantics=("parallel",)),
    )(x1t, x2t)
    return f1t.reshape(Bp)[:B], f2t.reshape(Bp)[:B]


# ----------------------------------------------------------------------------
# Pure-JAX reference (used for correctness check and the compute_grad branch)
# ----------------------------------------------------------------------------
def _toy_math(x1, x2):
    tanh_negx2 = jnp.tanh(-x2)
    f1 = jnp.log(jnp.maximum(jnp.abs(0.5 * (-x1 - 7.0) - tanh_negx2), LOWER)) + 6.0
    f2 = jnp.log(jnp.maximum(jnp.abs(0.5 * (-x1 + 3.0) + tanh_negx2 + 2.0), LOWER)) + 6.0
    c1 = jnp.maximum(jnp.tanh(x2 * 0.5), 0.0)
    c2 = jnp.maximum(jnp.tanh(-x2 * 0.5), 0.0)
    f1_sq = ((-x1 + 7.0) ** 2 + 0.1 * (-x2 - 8.0) ** 2) / 10.0 - 20.0
    f2_sq = ((-x1 - 7.0) ** 2 + 0.1 * (-x2 - 8.0) ** 2) / 10.0 - 20.0
    return f1 * c1 + f1_sq * c2, f2 * c1 + f2_sq * c2


def _toy_reference_vec(x):            # x: (2,) -> (2,)
    f1, f2 = _toy_math(x[0], x[1])
    return jnp.stack([f1, f2])


def _toy_reference_batch(x):          # x: (B,2) -> (B,2)
    f1, f2 = _toy_math(x[:, 0], x[:, 1])
    return jnp.stack([f1, f2], axis=-1)


# ----------------------------------------------------------------------------
# Public API mirroring Toy.forward / Toy.batch_forward
# ----------------------------------------------------------------------------
TOY_CENTERS = jnp.array([[-3.0, 0.0], [3.0, 0.0]], jnp.float32)  # self.centers


def toy_forward(x, compute_grad=False):
    """x: shape (2,) -> f: shape (2,).  With compute_grad, also returns the
    2x2 matrix g = [[g11, g21], [g12, g22]] (same layout as the torch code)."""
    x = jnp.asarray(x, jnp.float32)
    f1, f2 = _toy_pallas(x[0].reshape(1), x[1].reshape(1))
    f = jnp.concatenate([f1, f2])
    if compute_grad:
        # torch.autograd.grad equivalent; analytic AD on the (tiny) reference.
        J = jax.jacrev(_toy_reference_vec)(x)   # J[i, j] = d f_i / d x_j
        g = J.T                                 # rows=vars, cols=tasks
        return f, g
    return f


def toy_batch_forward(x):
    """x: shape (B, 2) -> f: shape (B, 2)."""
    x = jnp.asarray(x, jnp.float32)
    f1, f2 = _toy_pallas(x[:, 0], x[:, 1])
    return jnp.stack([f1, f2], axis=-1)


# ----------------------------------------------------------------------------
if __name__ == "__main__":
    key = jax.random.PRNGKey(0)
    k1, k2 = jax.random.split(key)

    # Small deterministic inputs consistent with the module: forward() takes a
    # 2-vector (x1, x2); batch_forward() takes (B, 2).
    x_single = jax.random.normal(k1, (2,), jnp.float32) * 5.0
    x_batch = jax.random.normal(k2, (8, 2), jnp.float32) * 5.0

    fwd = jax.jit(toy_forward)
    bfwd = jax.jit(toy_batch_forward)

    f = fwd(x_single)
    fb = bfwd(x_batch)
    jax.block_until_ready((f, fb))

    assert f.shape == (2,)
    assert fb.shape == (8, 2)

    # Correctness vs pure-JAX reference.
    np.testing.assert_allclose(np.asarray(f),
                               np.asarray(_toy_reference_vec(x_single)),
                               rtol=1e-5, atol=1e-5)
    np.testing.assert_allclose(np.asarray(fb),
                               np.asarray(_toy_reference_batch(x_batch)),
                               rtol=1e-5, atol=1e-5)

    # compute_grad branch (torch.autograd.grad analogue via jax.jacrev).
    f_cg, g = toy_forward(x_single, compute_grad=True)
    jax.block_until_ready((f_cg, g))
    assert g.shape == (2, 2)

    print("KERNEL_OK")
</pallas_src>

<mosaic_0001>
module attributes {stable_mosaic.version = 11 : i64} {
  func.func @_toy_kernel(%arg0: i32, %arg1: memref<8x128xf32, #tpu.memory_space<vmem>>, %arg2: memref<8x128xf32, #tpu.memory_space<vmem>>, %arg3: memref<8x128xf32, #tpu.memory_space<vmem>>, %arg4: memref<8x128xf32, #tpu.memory_space<vmem>>) attributes {dimension_semantics = [#tpu.dimension_semantics<parallel>], iteration_bounds = array<i64: 1>, scalar_prefetch = 0 : i64, scratch_operands = 0 : i64, tpu.core_type = #tpu.core_type<tc>, window_params = [{transform_indices = @transform_0, window_bounds = array<i64: 8, 128>}, {transform_indices = @transform_1, window_bounds = array<i64: 8, 128>}, {transform_indices = @transform_2, window_bounds = array<i64: 8, 128>}, {transform_indices = @transform_3, window_bounds = array<i64: 8, 128>}]} {
    %c0 = arith.constant 0 : index
    %c0_0 = arith.constant 0 : index
    %0 = vector.load %arg1[%c0, %c0_0] : memref<8x128xf32, #tpu.memory_space<vmem>>, vector<8x128xf32>
    %c0_1 = arith.constant 0 : index
    %c0_2 = arith.constant 0 : index
    %1 = vector.load %arg2[%c0_1, %c0_2] : memref<8x128xf32, #tpu.memory_space<vmem>>, vector<8x128xf32>
    %cst = arith.constant 0.000000e+00 : f32
    %2 = vector.broadcast %cst : f32 to vector<8x128xf32>
    %3 = arith.subf %2, %1 : vector<8x128xf32>
    %4 = math.tanh %3 : vector<8x128xf32>
    %cst_3 = arith.constant 0.000000e+00 : f32
    %5 = vector.broadcast %cst_3 : f32 to vector<8x128xf32>
    %6 = arith.subf %5, %0 : vector<8x128xf32>
    %cst_4 = arith.constant 7.000000e+00 : f32
    %7 = vector.broadcast %cst_4 : f32 to vector<8x128xf32>
    %8 = arith.subf %6, %7 : vector<8x128xf32>
    %cst_5 = arith.constant 5.000000e-01 : f32
    %9 = vector.broadcast %cst_5 : f32 to vector<8x128xf32>
    %10 = arith.mulf %9, %8 : vector<8x128xf32>
    %11 = arith.subf %10, %4 : vector<8x128xf32>
    %12 = math.absf %11 : vector<8x128xf32>
    %cst_6 = arith.constant 5.000000e-06 : f32
    %13 = vector.broadcast %cst_6 : f32 to vector<8x128xf32>
    %14 = arith.maximumf %12, %13 : vector<8x128xf32>
    %15 = math.log %14 : vector<8x128xf32>
    %cst_7 = arith.constant 6.000000e+00 : f32
    %16 = vector.broadcast %cst_7 : f32 to vector<8x128xf32>
    %17 = arith.addf %15, %16 : vector<8x128xf32>
    %cst_8 = arith.constant 0.000000e+00 : f32
    %18 = vector.broadcast %cst_8 : f32 to vector<8x128xf32>
    %19 = arith.subf %18, %0 : vector<8x128xf32>
    %cst_9 = arith.constant 3.000000e+00 : f32
    %20 = vector.broadcast %cst_9 : f32 to vector<8x128xf32>
    %21 = arith.addf %19, %20 : vector<8x128xf32>
    %cst_10 = arith.constant 5.000000e-01 : f32
    %22 = vector.broadcast %cst_10 : f32 to vector<8x128xf32>
    %23 = arith.mulf %22, %21 : vector<8x128xf32>
    %24 = arith.addf %23, %4 : vector<8x128xf32>
    %cst_11 = arith.constant 2.000000e+00 : f32
    %25 = vector.broadcast %cst_11 : f32 to vector<8x128xf32>
    %26 = arith.addf %24, %25 : vector<8x128xf32>
    %27 = math.absf %26 : vector<8x128xf32>
    %cst_12 = arith.constant 5.000000e-06 : f32
    %28 = vector.broadcast %cst_12 : f32 to vector<8x128xf32>
    %29 = arith.maximumf %27, %28 : vector<8x128xf32>
    %30 = math.log %29 : vector<8x128xf32>
    %cst_13 = arith.constant 6.000000e+00 : f32
    %31 = vector.broadcast %cst_13 : f32 to vector<8x128xf32>
    %32 = arith.addf %30, %31 : vector<8x128xf32>
    %cst_14 = arith.constant 5.000000e-01 : f32
    %33 = vector.broadcast %cst_14 : f32 to vector<8x128xf32>
    %34 = arith.mulf %1, %33 : vector<8x128xf32>
    %35 = math.tanh %34 : vector<8x128xf32>
    %cst_15 = arith.constant 0.000000e+00 : f32
    %36 = vector.broadcast %cst_15 : f32 to vector<8x128xf32>
    %37 = arith.maximumf %35, %36 : vector<8x128xf32>
    %cst_16 = arith.constant 0.000000e+00 : f32
    %38 = vector.broadcast %cst_16 : f32 to vector<8x128xf32>
    %39 = arith.subf %38, %1 : vector<8x128xf32>
    %cst_17 = arith.constant 5.000000e-01 : f32
    %40 = vector.broadcast %cst_17 : f32 to vector<8x128xf32>
    %41 = arith.mulf %39, %40 : vector<8x128xf32>
    %42 = math.tanh %41 : vector<8x128xf32>
    %cst_18 = arith.constant 0.000000e+00 : f32
    %43 = vector.broadcast %cst_18 : f32 to vector<8x128xf32>
    %44 = arith.maximumf %42, %43 : vector<8x128xf32>
    %cst_19 = arith.constant 0.000000e+00 : f32
    %45 = vector.broadcast %cst_19 : f32 to vector<8x128xf32>
    %46 = arith.subf %45, %0 : vector<8x128xf32>
    %cst_20 = arith.constant 7.000000e+00 : f32
    %47 = vector.broadcast %cst_20 : f32 to vector<8x128xf32>
    %48 = arith.addf %46, %47 : vector<8x128xf32>
    %49 = arith.mulf %48, %48 : vector<8x128xf32>
    %cst_21 = arith.constant 0.000000e+00 : f32
    %50 = vector.broadcast %cst_21 : f32 to vector<8x128xf32>
    %51 = arith.subf %50, %1 : vector<8x128xf32>
    %cst_22 = arith.constant 8.000000e+00 : f32
    %52 = vector.broadcast %cst_22 : f32 to vector<8x128xf32>
    %53 = arith.subf %51, %52 : vector<8x128xf32>
    %54 = arith.mulf %53, %53 : vector<8x128xf32>
    %cst_23 = arith.constant 1.000000e-01 : f32
    %55 = vector.broadcast %cst_23 : f32 to vector<8x128xf32>
    %56 = arith.mulf %55, %54 : vector<8x128xf32>
    %57 = arith.addf %49, %56 : vector<8x128xf32>
    %cst_24 = arith.constant 1.000000e+01 : f32
    %58 = vector.broadcast %cst_24 : f32 to vector<8x128xf32>
    %59 = arith.divf %57, %58 : vector<8x128xf32>
    %cst_25 = arith.constant 2.000000e+01 : f32
    %60 = vector.broadcast %cst_25 : f32 to vector<8x128xf32>
    %61 = arith.subf %59, %60 : vector<8x128xf32>
    %cst_26 = arith.constant 0.000000e+00 : f32
    %62 = vector.broadcast %cst_26 : f32 to vector<8x128xf32>
    %63 = arith.subf %62, %0 : vector<8x128xf32>
    %cst_27 = arith.constant 7.000000e+00 : f32
    %64 = vector.broadcast %cst_27 : f32 to vector<8x128xf32>
    %65 = arith.subf %63, %64 : vector<8x128xf32>
    %66 = arith.mulf %65, %65 : vector<8x128xf32>
    %cst_28 = arith.constant 0.000000e+00 : f32
    %67 = vector.broadcast %cst_28 : f32 to vector<8x128xf32>
    %68 = arith.subf %67, %1 : vector<8x128xf32>
    %cst_29 = arith.constant 8.000000e+00 : f32
    %69 = vector.broadcast %cst_29 : f32 to vector<8x128xf32>
    %70 = arith.subf %68, %69 : vector<8x128xf32>
    %71 = arith.mulf %70, %70 : vector<8x128xf32>
    %cst_30 = arith.constant 1.000000e-01 : f32
    %72 = vector.broadcast %cst_30 : f32 to vector<8x128xf32>
    %73 = arith.mulf %72, %71 : vector<8x128xf32>
    %74 = arith.addf %66, %73 : vector<8x128xf32>
    %cst_31 = arith.constant 1.000000e+01 : f32
    %75 = vector.broadcast %cst_31 : f32 to vector<8x128xf32>
    %76 = arith.divf %74, %75 : vector<8x128xf32>
    %cst_32 = arith.constant 2.000000e+01 : f32
    %77 = vector.broadcast %cst_32 : f32 to vector<8x128xf32>
    %78 = arith.subf %76, %77 : vector<8x128xf32>
    %79 = arith.mulf %17, %37 : vector<8x128xf32>
    %80 = arith.mulf %61, %44 : vector<8x128xf32>
    %81 = arith.addf %79, %80 : vector<8x128xf32>
    %c0_33 = arith.constant 0 : index
    %c0_34 = arith.constant 0 : index
    %82 = vector.load %arg3[%c0_33, %c0_34] : memref<8x128xf32, #tpu.memory_space<vmem>>, vector<8x128xf32>
    tpu.vector_store %arg3[%c0_33, %c0_34], %81 {strides = array<i32>} : memref<8x128xf32, #tpu.memory_space<vmem>>, vector<8x128xf32>,
    %83 = arith.mulf %32, %37 : vector<8x128xf32>
    %84 = arith.mulf %78, %44 : vector<8x128xf32>
    %85 = arith.addf %83, %84 : vector<8x128xf32>
    %c0_35 = arith.constant 0 : index
    %c0_36 = arith.constant 0 : index
    %86 = vector.load %arg4[%c0_35, %c0_36] : memref<8x128xf32, #tpu.memory_space<vmem>>, vector<8x128xf32>
    tpu.vector_store %arg4[%c0_35, %c0_36], %85 {strides = array<i32>} : memref<8x128xf32, #tpu.memory_space<vmem>>, vector<8x128xf32>,
    return
  }
  func.func @transform_0(%arg0: i32) -> (i32, i32) {
    %c0_i32 = arith.constant 0 : i32
    %c0_i32_0 = arith.constant 0 : i32
    return %arg0, %c0_i32 : i32, i32
  }
  func.func @transform_1(%arg0: i32) -> (i32, i32) {
    %c0_i32 = arith.constant 0 : i32
    %c0_i32_0 = arith.constant 0 : i32
    return %arg0, %c0_i32 : i32, i32
  }
  func.func @transform_2(%arg0: i32) -> (i32, i32) {
    %c0_i32 = arith.constant 0 : i32
    %c0_i32_0 = arith.constant 0 : i32
    return %arg0, %c0_i32 : i32, i32
  }
  func.func @transform_3(%arg0: i32) -> (i32, i32) {
    %c0_i32 = arith.constant 0 : i32
    %c0_i32_0 = arith.constant 0 : i32
    return %arg0, %c0_i32 : i32, i32
  }
}

</mosaic_0001>

<llo_original>
// kernel: toy_forward.1
$region0: #{toy_forward.1}
  #allocation0 [shape = 'u32[]', space=smem, size = 0x4, offset = 0x4, fixed_abs, tag = 'smem constant byte address 0x4 - core index']
  #allocation1 [shape = 'u32[144,128]{1,0:T(1,128)}', space=vmem, size = 0x12000, scoped, tag = 'internal scratch']
  %s0 = inlined_call_operand.vmem [shape: f32[8,128], index: 0, kind: input, shape index: {}]
  %s1 = inlined_call_operand.vmem [shape: f32[8,128], index: 1, kind: input, shape index: {}]
  %s2 = inlined_call_operand.vmem [shape: f32[8,128], index: 2, kind: output, shape index: {0}]
  %s3 = inlined_call_operand.vmem [shape: f32[8,128], index: 3, kind: output, shape index: {1}]
  %4 = xla_tuple %s2, %s3
  %s5 = sld [smem:[#allocation0]]
  $region26: #{toy_forward.1} parent=0
    _
  %s7 = ssub.s32 1, %s5
  %s8 = scalar_select 0, %s7, %s5
  // Predicated region
  $region2: #{toy_forward.1} parent=0 // pred_check
    _
  $region3: #{toy_forward.1} parent=0 // pred_check_branch
    %10 = sbr.rel (0) target = $region5
  $region4: #{toy_forward.1} parent=0 // pred_region
    _
  $region5: #{toy_forward.1} parent=0 // pred_fallthru
    _
  // Predicated region
  $region6: #{toy_forward.1} parent=0 // pred_check
    _
  $region7: #{toy_forward.1} parent=0 // pred_check_branch
    %12 = sbr.rel (0) target = $region9
  $region8: #{toy_forward.1} parent=0 // pred_region
    _
  $region9: #{toy_forward.1} parent=0 // pred_fallthru
    _
  %v13 = vld [vmem:[%s0] sm:$0xff]
  %v14 = vld [vmem:[%s1] sm:$0xff]
  %v15 = vsub.f32 0.0, %v14
  %v16 = vtanh.pop %v15
  %v17 = vsub.f32 0.0, %v13
  %v18 = vsub.f32 %v17, 7.0
  %v19 = vmul.f32 %v18, 0.5
  %v20 = vsub.f32 %v19, %v16
  %v21 = vand.u32 2147483647, %v20
  %v22 = vmax.f32 %v21, 5e-06
  %v23 = vlog2.pop %v22
  %v24 = vmul.f32 %v23, 0.6931472
  %v25 = vadd.f32 %v24, 6.0
  %v26 = vadd.f32 %v17, 3.0
  %v27 = vmul.f32 %v26, 0.5
  %v28 = vadd.f32 %v27, %v16
  %v29 = vadd.f32 %v28, 2.0
  %v30 = vand.u32 2147483647, %v29
  %v31 = vmax.f32 %v30, 5e-06
  %v32 = vlog2.pop %v31
  %v33 = vmul.f32 %v32, 0.6931472
  %v34 = vadd.f32 %v33, 6.0
  %v35 = vmul.f32 %v14, 0.5
  %v36 = vtanh.pop %v35
  %v37 = vmax.f32 %v36, 0.0
  %v38 = vmul.f32 %v15, 0.5
  %v39 = vtanh.pop %v38
  %v40 = vmax.f32 %v39, 0.0
  %v41 = vadd.f32 %v17, 7.0
  %v42 = vmul.f32 %v41, %v41
  %v43 = vsub.f32 %v15, 8.0
  %v44 = vmul.f32 %v43, %v43
  %v45 = vmul.f32 %v44, 0.1
  %v46 = vadd.f32 %v42, %v45
  %v47 = vrcp.pop 10.0
  %v48 = vmul.f32 %v46, %v47
  %v49 = vsub.f32 %v48, 20.0
  %v50 = vmul.f32 %v18, %v18
  %v51 = vadd.f32 %v50, %v45
  %v52 = vmul.f32 %v51, %v47
  %v53 = vsub.f32 %v52, 20.0
  %v54 = vmul.f32 %v25, %v37
  %v55 = vmul.f32 %v49, %v40
  %v56 = vadd.f32 %v54, %v55
  %57 = vst [vmem:[%s2] sm:$0xff] %v56
  %v58 = vmul.f32 %v34, %v37
  %v59 = vmul.f32 %v53, %v40
  %v60 = vadd.f32 %v58, %v59
  %61 = vst [vmem:[%s3] sm:$0xff] %v60
  // Predicated region
  $region10: #{toy_forward.1} parent=0 // pred_check
    _
  $region11: #{toy_forward.1} parent=0 // pred_check_branch
    %63 = sbr.rel (0) target = $region13
  $region12: #{toy_forward.1} parent=0 // pred_region
    _
  $region13: #{toy_forward.1} parent=0 // pred_fallthru
    _
  // Predicated region
  $region14: #{toy_forward.1} parent=0 // pred_check
    _
  $region15: #{toy_forward.1} parent=0 // pred_check_branch
    %65 = sbr.rel (0) target = $region17
  $region16: #{toy_forward.1} parent=0 // pred_region
    _
  $region17: #{toy_forward.1} parent=0 // pred_fallthru
    _
  // Predicated region
  $region18: #{toy_forward.1} parent=0 // pred_check
    _
  $region19: #{toy_forward.1} parent=0 // pred_check_branch
    %67 = sbr.rel (0) target = $region21
  $region20: #{toy_forward.1} parent=0 // pred_region
    _
  $region21: #{toy_forward.1} parent=0 // pred_fallthru
    _
  // Predicated region
  $region22: #{toy_forward.1} parent=0 // pred_check
    _
  $region23: #{toy_forward.1} parent=0 // pred_check_branch
    %69 = sbr.rel (0) target = $region25
  $region24: #{toy_forward.1} parent=0 // pred_region
    _
  $region25: #{toy_forward.1} parent=0 // pred_fallthru
    _

</llo_original>
